<compile_context>
chip_gen: v6e
topology: v6e:2x2x1
jax: 0.10.0
libtpu: 0.0.40
codegen_flags: <defaults>
</compile_context>

<pallas_src>
import jax
import jax.numpy as jnp
from jax.experimental import pallas as pl
from jax.experimental.pallas import tpu as pltpu


HIDDEN = 512  # fixed by the module definition


def _make_mhp_kernel(num_heads, hidden, d_out):
    """Build the kernel closed over the static head count / dims."""

    def kernel(x_ref, w1_ref, b1_ref, w2_ref, b2_ref, out_ref):
        # x_ref : (B, D_in)
        # w1_ref: (D_in, H*hidden)   fused layer-1 weight (all heads)
        # b1_ref: (1, H*hidden)
        # w2_ref: (H, hidden, D_out) stacked layer-2 weights
        # b2_ref: (H, 1, D_out)
        # out_ref: (B, H*D_out)      fused lane-dense output slab
        #
        # Cast the LHS to the weight dtype so bf16 weights take the native bf16
        # MXU path on layer 1 (mixed f32 x bf16 would promote and miss it).
        x = x_ref[...].astype(w1_ref.dtype)

        # One wide MXU issue for all heads' first layers; f32 accumulation.
        h_all = jnp.dot(x, w1_ref[...], preferred_element_type=jnp.float32)
        # Bias + ReLU in f32 on the VPU (v5e-safe: no bf16 elementwise there).
        h_all = jnp.maximum(h_all + b1_ref[...].astype(jnp.float32), 0.0)
        # Cast only immediately before the layer-2 dot (no-op for f32 weights).
        h_all = h_all.astype(w2_ref.dtype)

        # Per-head second layer; unrolled at trace time (H is small).  Each head
        # writes its own 128-aligned column block of the fused output slab.
        for h in range(num_heads):
            h_h = h_all[:, h * hidden:(h + 1) * hidden]
            o = jnp.dot(h_h, w2_ref[h], preferred_element_type=jnp.float32)
            o = o + b2_ref[h].astype(jnp.float32)
            out_ref[:, h * d_out:(h + 1) * d_out] = o.astype(out_ref.dtype)

    return kernel


def prepare_params(w1, b1, w2, b2):
    """One-time (init-path) re-layout of PyTorch-style per-head params into the
    kernel-ready fused slabs.  Do NOT call this per forward."""
    H, D_in, hidden = w1.shape
    assert hidden == HIDDEN
    w1_all = jnp.transpose(w1, (1, 0, 2)).reshape(D_in, H * hidden)
    b1_all = jnp.transpose(b1, (1, 0, 2)).reshape(1, H * hidden)
    return w1_all, b1_all, w2, b2


def multi_head_projector(x, w1_all, b1_all, w2, b2):
    """x: (B, D_in).  w1_all: (D_in, H*512), b1_all: (1, H*512),
    w2: (H, 512, D_out), b2: (H, 1, D_out) — as produced by prepare_params().
    Returns a list of H arrays of shape (B, D_out)."""
    B, D_in = x.shape
    H, hidden, D_out = w2.shape
    assert hidden == HIDDEN
    assert w1_all.shape == (D_in, H * hidden)

    kernel = _make_mhp_kernel(H, hidden, D_out)

    # No grid: single invocation, everything VMEM-resident (~1 MiB total at
    # these sizes, far under any scoped-VMEM limit on v5e/v6e/v7x).
    # NOTE: for large B / D_in / D_out, re-introduce grid axes (batch/head
    # "parallel" for megacore on v7x, K "arbitrary" with a VMEM accumulator)
    # and budget vmem_limit_bytes against v7x's 64 MiB physical VMEM.
    vmem = pltpu.MemorySpace.VMEM
    out = pl.pallas_call(
        kernel,
        out_shape=jax.ShapeDtypeStruct((B, H * D_out), x.dtype),
        in_specs=[pl.BlockSpec(memory_space=vmem)] * 5,
        out_specs=pl.BlockSpec(memory_space=vmem),
    )(x, w1_all, b1_all, w2, b2)

    # PyTorch forward returns a Python list of per-head projections; split the
    # fused slab in the wrapper (layout plumbing, not kernel compute).
    return [out[:, h * D_out:(h + 1) * D_out] for h in range(H)]


def init_params(key, num_heads, input_dim, output_dim, dtype=jnp.float32):
    """Deterministic synthetic init (uniform, PyTorch-Linear-style bounds)."""
    ks = jax.random.split(key, 4)
    bound1 = 1.0 / (input_dim ** 0.5)
    bound2 = 1.0 / (HIDDEN ** 0.5)
    w1 = jax.random.uniform(ks[0], (num_heads, input_dim, HIDDEN),
                            jnp.float32, -bound1, bound1).astype(dtype)
    b1 = jax.random.uniform(ks[1], (num_heads, 1, HIDDEN),
                            jnp.float32, -bound1, bound1).astype(dtype)
    w2 = jax.random.uniform(ks[2], (num_heads, HIDDEN, output_dim),
                            jnp.float32, -bound2, bound2).astype(dtype)
    b2 = jax.random.uniform(ks[3], (num_heads, 1, output_dim),
                            jnp.float32, -bound2, bound2).astype(dtype)
    return w1, b1, w2, b2


def _reference(x, w1, b1, w2, b2):
    """Plain-JAX f32 reference matching the PyTorch module."""
    outs = []
    for h in range(w1.shape[0]):
        t = jnp.maximum(x @ w1[h] + b1[h], 0.0)
        outs.append(t @ w2[h] + b2[h])
    return outs


def _reference_mixed(x, w1, b1, w2, b2):
    """Reference mirroring the kernel's mixed-precision steps for bf16 weights."""
    outs = []
    xw = x.astype(w1.dtype)
    for h in range(w1.shape[0]):
        t = jnp.dot(xw, w1[h], preferred_element_type=jnp.float32)
        t = jnp.maximum(t + b1[h].astype(jnp.float32), 0.0).astype(w2.dtype)
        o = jnp.dot(t, w2[h], preferred_element_type=jnp.float32)
        o = o + b2[h].astype(jnp.float32)
        outs.append(o.astype(x.dtype))
    return outs


if __name__ == "__main__":
    batch = 8
    input_dim = 32
    output_dim = 128
    num_heads = 3

    key = jax.random.PRNGKey(0)
    kx, kp = jax.random.split(key)
    x = jax.random.normal(kx, (batch, input_dim), jnp.float32)

    # ---- f32 path: strict match against the PyTorch-equivalent reference ----
    w1, b1, w2, b2 = init_params(kp, num_heads, input_dim, output_dim,
                                 dtype=jnp.float32)
    fused = prepare_params(w1, b1, w2, b2)   # one-time init-path relayout
    projections = multi_head_projector(x, *fused)
    projections = [jax.block_until_ready(p) for p in projections]

    refs = _reference(x, w1, b1, w2, b2)
    assert len(projections) == num_heads
    for p, r in zip(projections, refs):
        assert p.shape == (batch, output_dim)
        assert jnp.allclose(p, r, atol=1e-4, rtol=1e-4)

    # ---- bf16-weight path (halves weight DMA bytes; f32 accumulation) ----
    w1b = w1.astype(jnp.bfloat16)
    b1b = b1.astype(jnp.bfloat16)
    w2b = w2.astype(jnp.bfloat16)
    b2b = b2.astype(jnp.bfloat16)
    fused_bf16 = prepare_params(w1b, b1b, w2b, b2b)
    proj_bf16 = multi_head_projector(x, *fused_bf16)
    proj_bf16 = [jax.block_until_ready(p) for p in proj_bf16]

    refs_bf16 = _reference_mixed(x, w1b, b1b, w2b, b2b)
    for p, r in zip(proj_bf16, refs_bf16):
        assert p.shape == (batch, output_dim)
        assert jnp.allclose(p, r, atol=2e-2, rtol=2e-2)

    print("KERNEL_OK")
</pallas_src>

<mosaic_0001>
module attributes {stable_mosaic.version = 11 : i64} {
  func.func @kernel(%arg0: memref<8x32xf32, #tpu.memory_space<vmem>>, %arg1: memref<32x1536xf32, #tpu.memory_space<vmem>>, %arg2: memref<1x1536xf32, #tpu.memory_space<vmem>>, %arg3: memref<3x512x128xf32, #tpu.memory_space<vmem>>, %arg4: memref<3x1x128xf32, #tpu.memory_space<vmem>>, %arg5: memref<8x384xf32, #tpu.memory_space<vmem>>) attributes {dimension_semantics = [], scalar_prefetch = 0 : i64, scratch_operands = 0 : i64, tpu.core_type = #tpu.core_type<tc>} {
    %c0 = arith.constant 0 : index
    %c0_0 = arith.constant 0 : index
    %0 = vector.load %arg0[%c0, %c0_0] : memref<8x32xf32, #tpu.memory_space<vmem>>, vector<8x32xf32>
    %c0_1 = arith.constant 0 : index
    %c0_2 = arith.constant 0 : index
    %1 = vector.load %arg1[%c0_1, %c0_2] : memref<32x1536xf32, #tpu.memory_space<vmem>>, vector<32x1536xf32>
    %cst = arith.constant dense<0.000000e+00> : vector<8x1536xf32>
    %2 = tpu.matmul %0, %1, %cst {dimension_numbers = #tpu.dot_dimension_numbers<[1], [0], [0], [1], [0, 0, 1, 1], [], []>} : vector<8x32xf32>, vector<32x1536xf32>, vector<8x1536xf32> -> vector<8x1536xf32>
    %c0_3 = arith.constant 0 : index
    %c0_4 = arith.constant 0 : index
    %3 = vector.load %arg2[%c0_3, %c0_4] : memref<1x1536xf32, #tpu.memory_space<vmem>>, vector<1x1536xf32>
    %4 = vector.broadcast %3 : vector<1x1536xf32> to vector<8x1536xf32>
    %5 = arith.addf %2, %4 : vector<8x1536xf32>
    %cst_5 = arith.constant 0.000000e+00 : f32
    %6 = vector.broadcast %cst_5 : f32 to vector<8x1536xf32>
    %7 = arith.maximumf %5, %6 : vector<8x1536xf32>
    %8 = vector.extract_strided_slice %7 {offsets = [0, 0], sizes = [8, 512], strides = [1, 1]} : vector<8x1536xf32> to vector<8x512xf32>
    %c0_6 = arith.constant 0 : index
    %c0_7 = arith.constant 0 : index
    %c0_8 = arith.constant 0 : index
    %9 = vector.load %arg3[%c0_6, %c0_7, %c0_8] : memref<3x512x128xf32, #tpu.memory_space<vmem>>, vector<1x512x128xf32>
    %10 = vector.shape_cast %9 : vector<1x512x128xf32> to vector<512x128xf32>
    %cst_9 = arith.constant dense<0.000000e+00> : vector<8x128xf32>
    %11 = tpu.matmul %8, %10, %cst_9 {dimension_numbers = #tpu.dot_dimension_numbers<[1], [0], [0], [1], [0, 0, 1, 1], [], []>} : vector<8x512xf32>, vector<512x128xf32>, vector<8x128xf32> -> vector<8x128xf32>
    %c0_10 = arith.constant 0 : index
    %c0_11 = arith.constant 0 : index
    %c0_12 = arith.constant 0 : index
    %12 = vector.load %arg4[%c0_10, %c0_11, %c0_12] : memref<3x1x128xf32, #tpu.memory_space<vmem>>, vector<1x1x128xf32>
    %13 = vector.shape_cast %12 : vector<1x1x128xf32> to vector<1x128xf32>
    %14 = vector.broadcast %13 : vector<1x128xf32> to vector<8x128xf32>
    %15 = arith.addf %11, %14 : vector<8x128xf32>
    %c0_13 = arith.constant 0 : index
    %c0_14 = arith.constant 0 : index
    %16 = vector.load %arg5[%c0_13, %c0_14] : memref<8x384xf32, #tpu.memory_space<vmem>>, vector<8x128xf32>
    tpu.vector_store %arg5[%c0_13, %c0_14], %15 {strides = array<i32>} : memref<8x384xf32, #tpu.memory_space<vmem>>, vector<8x128xf32>,
    %17 = vector.extract_strided_slice %7 {offsets = [0, 512], sizes = [8, 512], strides = [1, 1]} : vector<8x1536xf32> to vector<8x512xf32>
    %c1 = arith.constant 1 : index
    %c0_15 = arith.constant 0 : index
    %c0_16 = arith.constant 0 : index
    %18 = vector.load %arg3[%c1, %c0_15, %c0_16] : memref<3x512x128xf32, #tpu.memory_space<vmem>>, vector<1x512x128xf32>
    %19 = vector.shape_cast %18 : vector<1x512x128xf32> to vector<512x128xf32>
    %cst_17 = arith.constant dense<0.000000e+00> : vector<8x128xf32>
    %20 = tpu.matmul %17, %19, %cst_17 {dimension_numbers = #tpu.dot_dimension_numbers<[1], [0], [0], [1], [0, 0, 1, 1], [], []>} : vector<8x512xf32>, vector<512x128xf32>, vector<8x128xf32> -> vector<8x128xf32>
    %c1_18 = arith.constant 1 : index
    %c0_19 = arith.constant 0 : index
    %c0_20 = arith.constant 0 : index
    %21 = vector.load %arg4[%c1_18, %c0_19, %c0_20] : memref<3x1x128xf32, #tpu.memory_space<vmem>>, vector<1x1x128xf32>
    %22 = vector.shape_cast %21 : vector<1x1x128xf32> to vector<1x128xf32>
    %23 = vector.broadcast %22 : vector<1x128xf32> to vector<8x128xf32>
    %24 = arith.addf %20, %23 : vector<8x128xf32>
    %c0_21 = arith.constant 0 : index
    %c128 = arith.constant 128 : index
    %25 = vector.load %arg5[%c0_21, %c128] : memref<8x384xf32, #tpu.memory_space<vmem>>, vector<8x128xf32>
    tpu.vector_store %arg5[%c0_21, %c128], %24 {strides = array<i32>} : memref<8x384xf32, #tpu.memory_space<vmem>>, vector<8x128xf32>,
    %26 = vector.extract_strided_slice %7 {offsets = [0, 1024], sizes = [8, 512], strides = [1, 1]} : vector<8x1536xf32> to vector<8x512xf32>
    %c2 = arith.constant 2 : index
    %c0_22 = arith.constant 0 : index
    %c0_23 = arith.constant 0 : index
    %27 = vector.load %arg3[%c2, %c0_22, %c0_23] : memref<3x512x128xf32, #tpu.memory_space<vmem>>, vector<1x512x128xf32>
    %28 = vector.shape_cast %27 : vector<1x512x128xf32> to vector<512x128xf32>
    %cst_24 = arith.constant dense<0.000000e+00> : vector<8x128xf32>
    %29 = tpu.matmul %26, %28, %cst_24 {dimension_numbers = #tpu.dot_dimension_numbers<[1], [0], [0], [1], [0, 0, 1, 1], [], []>} : vector<8x512xf32>, vector<512x128xf32>, vector<8x128xf32> -> vector<8x128xf32>
    %c2_25 = arith.constant 2 : index
    %c0_26 = arith.constant 0 : index
    %c0_27 = arith.constant 0 : index
    %30 = vector.load %arg4[%c2_25, %c0_26, %c0_27] : memref<3x1x128xf32, #tpu.memory_space<vmem>>, vector<1x1x128xf32>
    %31 = vector.shape_cast %30 : vector<1x1x128xf32> to vector<1x128xf32>
    %32 = vector.broadcast %31 : vector<1x128xf32> to vector<8x128xf32>
    %33 = arith.addf %29, %32 : vector<8x128xf32>
    %c0_28 = arith.constant 0 : index
    %c256 = arith.constant 256 : index
    %34 = vector.load %arg5[%c0_28, %c256] : memref<8x384xf32, #tpu.memory_space<vmem>>, vector<8x128xf32>
    tpu.vector_store %arg5[%c0_28, %c256], %33 {strides = array<i32>} : memref<8x384xf32, #tpu.memory_space<vmem>>, vector<8x128xf32>,
    return
  }
}

</mosaic_0001>

<llo_original>
// kernel: tpu_custom_call.1
$region0: #{tpu_custom_call.1}
  #allocation0 [shape = 'u32[]', space=smem, size = 0x4, offset = 0x4, fixed_abs, tag = 'smem constant byte address 0x4 - core index']
  #allocation1 [shape = 'u32[144,128]{1,0:T(1,128)}', space=vmem, size = 0x12000, scoped, tag = 'internal scratch']
  %s0 = inlined_call_operand.hbm [shape: f32[8,32], index: 0, kind: input, shape index: {}]
  %s1 = inlined_call_operand.hbm [shape: f32[32,1536], index: 1, kind: input, shape index: {}]
  %s2 = inlined_call_operand.hbm [shape: f32[1,1536], index: 2, kind: input, shape index: {}]
  %s3 = inlined_call_operand.hbm [shape: f32[3,512,128], index: 3, kind: input, shape index: {}]
  %s4 = inlined_call_operand.vmem [shape: f32[3,1,128], index: 4, kind: input, shape index: {}]
  %s5 = inlined_call_operand.hbm [shape: f32[8,384], index: 5, kind: output, shape index: {}]
  %s6 = sld [smem:[#allocation0]]
  $region46: #{tpu_custom_call.1} parent=0
    _
  %s8 = ssub.s32 1, %s6
  %s9 = scalar_select 0, %s8, %s6
  $region1: #{tpu_custom_call.1} parent=0
    #allocation2 [shape = 'u8[4096]{0}', space=vmem, size = 0x1000, scoped, tag = 'input window, operand 0, single buffered']
    #allocation3 [shape = 's32[1]{0}', space=sflag, size = 0x4, scoped, tag = 'scoped memory for tpu_custom_call.1']
    #allocation4 [shape = 's32[1]{0}', space=sflag, size = 0x4, scoped, tag = 'scoped memory for tpu_custom_call.1']
    #allocation5 [shape = 'u8[196608]{0}', space=vmem, size = 0x30000, scoped, tag = 'input window, operand 1, single buffered']
    #allocation6 [shape = 's32[1]{0}', space=sflag, size = 0x4, scoped, tag = 'scoped memory for tpu_custom_call.1']
    #allocation7 [shape = 'u8[6144]{0}', space=vmem, size = 0x1800, scoped, tag = 'input window, operand 2, single buffered']
    #allocation8 [shape = 'u8[786432]{0}', space=vmem, size = 0xc0000, scoped, tag = 'input window, operand 3, single buffered']
    #allocation9 [shape = 's32[1]{0}', space=sflag, size = 0x4, scoped, tag = 'scoped memory for tpu_custom_call.1']
    #allocation10 [shape = 'u8[12288]{0}', space=vmem, size = 0x3000, scoped, tag = 'output window, operand 0, single buffered']
    %10 = vsyncpa [#allocation3], 0
    %11 = vsyncpa [#allocation6], 0
    %12 = vsyncpa [#allocation9], 0
    %13 = vsyncpa [#allocation4], 0
    // Predicated region
    $region2: #{tpu_custom_call.1} parent=1 // pred_check
      _
    $region3: #{tpu_custom_call.1} parent=1 // pred_check_branch
      %15 = sbr.rel (0) target = $region5
    $region4: #{tpu_custom_call.1} parent=1 // pred_region
      %s17 = ssub.s32 128, 128
      %18 = vsyncadd [#allocation3], %s17
      %s20 = sshll.u32 [#allocation2], 4
      %s21 = int_to_ptr.vmem [resolvable:$true] %s20
      %23 = dma.hbm_to_vmem [thread:$0]  %s0, 128, %s21, [#allocation3]
    $region5: #{tpu_custom_call.1} parent=1 // pred_fallthru
      _
    // Predicated region
    $region6: #{tpu_custom_call.1} parent=1 // pred_check
      _
    $region7: #{tpu_custom_call.1} parent=1 // pred_check_branch
      %25 = sbr.rel (0) target = $region9
    $region8: #{tpu_custom_call.1} parent=1 // pred_region
      %s27 = ssub.s32 6144, 6144
      %28 = vsyncadd [#allocation6], %s27
      %s29 = sshll.u32 [#allocation5], 4
      %s30 = int_to_ptr.vmem [resolvable:$true] %s29
      %35 = dma.hbm_to_vmem [thread:$0]  %s1, 6144, %s30, [#allocation6], 1536, 1536, 96
    $region9: #{tpu_custom_call.1} parent=1 // pred_fallthru
      _
    // Predicated region
    $region10: #{tpu_custom_call.1} parent=1 // pred_check
      _
    $region11: #{tpu_custom_call.1} parent=1 // pred_check_branch
      %37 = sbr.rel (0) target = $region13
    $region12: #{tpu_custom_call.1} parent=1 // pred_region
      %s39 = ssub.s32 192, 192
      %40 = vsyncadd [#allocation6], %s39
      %s42 = sshll.u32 [#allocation7], 4
      %s43 = int_to_ptr.vmem [resolvable:$true] %s42
      %45 = dma.hbm_to_vmem [thread:$0]  %s2, 192, %s43, [#allocation6]
    $region13: #{tpu_custom_call.1} parent=1 // pred_fallthru
      _
    // Predicated region
    $region14: #{tpu_custom_call.1} parent=1 // pred_check
      _
    $region15: #{tpu_custom_call.1} parent=1 // pred_check_branch
      %47 = sbr.rel (0) target = $region17
    $region16: #{tpu_custom_call.1} parent=1 // pred_region
      %s49 = ssub.s32 24576, 24576
      %50 = vsyncadd [#allocation9], %s49
      %s51 = sshll.u32 [#allocation8], 4
      %s52 = int_to_ptr.vmem [resolvable:$true] %s51
      %57 = dma.hbm_to_vmem [thread:$0]  %s3, 24576, %s52, [#allocation9], 128, 128, 8
    $region17: #{tpu_custom_call.1} parent=1 // pred_fallthru
      _
    // Predicated region
    $region18: #{tpu_custom_call.1} parent=1 // pred_check
      _
    $region19: #{tpu_custom_call.1} parent=1 // pred_check_branch
      %59 = sbr.rel (0) target = $region21
    $region20: #{tpu_custom_call.1} parent=1 // pred_region
      _
    $region21: #{tpu_custom_call.1} parent=1 // pred_fallthru
      _
    // Predicated region
    $region22: #{tpu_custom_call.1} parent=1 // pred_check
      _
    $region23: #{tpu_custom_call.1} parent=1 // pred_check_branch
      %61 = sbr.rel (0) target = $region25
    $region24: #{tpu_custom_call.1} parent=1 // pred_region
      %62 = dma.done [#allocation3], 128
    $region25: #{tpu_custom_call.1} parent=1 // pred_fallthru
      _
    // Predicated region
    $region26: #{tpu_custom_call.1} parent=1 // pred_check
      _
    $region27: #{tpu_custom_call.1} parent=1 // pred_check_branch
      %64 = sbr.rel (0) target = $region29
    $region28: #{tpu_custom_call.1} parent=1 // pred_region
      %65 = dma.done [#allocation6], 6144
    $region29: #{tpu_custom_call.1} parent=1 // pred_fallthru
      _
    // Predicated region
    $region30: #{tpu_custom_call.1} parent=1 // pred_check
      _
    $region31: #{tpu_custom_call.1} parent=1 // pred_check_branch
      %67 = sbr.rel (0) target = $region33
    $region32: #{tpu_custom_call.1} parent=1 // pred_region
      %68 = dma.done [#allocation6], 192
    $region33: #{tpu_custom_call.1} parent=1 // pred_fallthru
      _
    // Predicated region
    $region34: #{tpu_custom_call.1} parent=1 // pred_check
      _
    $region35: #{tpu_custom_call.1} parent=1 // pred_check_branch
      %70 = sbr.rel (0) target = $region37
    $region36: #{tpu_custom_call.1} parent=1 // pred_region
      %71 = dma.done [#allocation9], 24576
    $region37: #{tpu_custom_call.1} parent=1 // pred_fallthru
      _
    %v72 = vld [vmem:[#allocation2] sm:$0xff]
    %v73 = vld [vmem:[#allocation5] sm:$0xff]
    %v74 = vld [vmem:[#allocation5 + $0x8] sm:$0xff]
    %v75 = vld [vmem:[#allocation5 + $0x10] sm:$0xff]
    %v76 = vld [vmem:[#allocation5 + $0x18] sm:$0xff]
    %v77 = vld [vmem:[#allocation5 + $0x20] sm:$0xff]
    %v78 = vld [vmem:[#allocation5 + $0x28] sm:$0xff]
    %v79 = vld [vmem:[#allocation5 + $0x30] sm:$0xff]
    %v80 = vld [vmem:[#allocation5 + $0x38] sm:$0xff]
    %v81 = vld [vmem:[#allocation5 + $0x40] sm:$0xff]
    %v82 = vld [vmem:[#allocation5 + $0x48] sm:$0xff]
    %v83 = vld [vmem:[#allocation5 + $0x50] sm:$0xff]
    %v84 = vld [vmem:[#allocation5 + $0x58] sm:$0xff]
    %v85 = vld [vmem:[#allocation5 + $0x60] sm:$0xff]
    %v86 = vld [vmem:[#allocation5 + $0x68] sm:$0xff]
    %v87 = vld [vmem:[#allocation5 + $0x70] sm:$0xff]
    %v88 = vld [vmem:[#allocation5 + $0x78] sm:$0xff]
    %v89 = vld [vmem:[#allocation5 + $0x80] sm:$0xff]
    %v90 = vld [vmem:[#allocation5 + $0x88] sm:$0xff]
    %v91 = vld [vmem:[#allocation5 + $0x90] sm:$0xff]
    %v92 = vld [vmem:[#allocation5 + $0x98] sm:$0xff]
    %v93 = vld [vmem:[#allocation5 + $0xa0] sm:$0xff]
    %v94 = vld [vmem:[#allocation5 + $0xa8] sm:$0xff]
    %v95 = vld [vmem:[#allocation5 + $0xb0] sm:$0xff]
    %v96 = vld [vmem:[#allocation5 + $0xb8] sm:$0xff]
    %v97 = vld [vmem:[#allocation5 + $0xc0] sm:$0xff]
    %v98 = vld [vmem:[#allocation5 + $0xc8] sm:$0xff]
    %v99 = vld [vmem:[#allocation5 + $0xd0] sm:$0xff]
    %v100 = vld [vmem:[#allocation5 + $0xd8] sm:$0xff]
    %v101 = vld [vmem:[#allocation5 + $0xe0] sm:$0xff]
    %v102 = vld [vmem:[#allocation5 + $0xe8] sm:$0xff]
    %v103 = vld [vmem:[#allocation5 + $0xf0] sm:$0xff]
    %v104 = vld [vmem:[#allocation5 + $0xf8] sm:$0xff]
    %v105 = vld [vmem:[#allocation5 + $0x100] sm:$0xff]
    %v106 = vld [vmem:[#allocation5 + $0x108] sm:$0xff]
    %v107 = vld [vmem:[#allocation5 + $0x110] sm:$0xff]
    %v108 = vld [vmem:[#allocation5 + $0x118] sm:$0xff]
    %v109 = vld [vmem:[#allocation5 + $0x120] sm:$0xff]
    %v110 = vld [vmem:[#allocation5 + $0x128] sm:$0xff]
    %v111 = vld [vmem:[#allocation5 + $0x130] sm:$0xff]
    %v112 = vld [vmem:[#allocation5 + $0x138] sm:$0xff]
    %v113 = vld [vmem:[#allocation5 + $0x140] sm:$0xff]
    %v114 = vld [vmem:[#allocation5 + $0x148] sm:$0xff]
    %v115 = vld [vmem:[#allocation5 + $0x150] sm:$0xff]
    %v116 = vld [vmem:[#allocation5 + $0x158] sm:$0xff]
    %v117 = vld [vmem:[#allocation5 + $0x160] sm:$0xff]
    %v118 = vld [vmem:[#allocation5 + $0x168] sm:$0xff]
    %v119 = vld [vmem:[#allocation5 + $0x170] sm:$0xff]
    %v120 = vld [vmem:[#allocation5 + $0x178] sm:$0xff]
    %v121 = vld [vmem:[#allocation7] sm:$0xff]
    %v122 = vld [vmem:[#allocation7 + $0x8] sm:$0xf]
    %v125 = vlaneseq
    %v126 = vshrl.u32 %v125, 7
    %v127 = vsub.s32 0, %v126
    %v128 = vrot.slane %v121, %v127
    %v129 = vlaneseq
    %v130 = vshrl.u32 %v129, 7
    %v131 = vsub.s32 1, %v130
    %v132 = vrot.slane %v121, %v131
    %v133 = vlaneseq
    %v134 = vshrl.u32 %v133, 7
    %v135 = vsub.s32 2, %v134
    %v136 = vrot.slane %v121, %v135
    %v137 = vlaneseq
    %v138 = vshrl.u32 %v137, 7
    %v139 = vsub.s32 3, %v138
    %v140 = vrot.slane %v121, %v139
    %v141 = vlaneseq
    %v142 = vshrl.u32 %v141, 7
    %v143 = vsub.s32 4, %v142
    %v144 = vrot.slane %v121, %v143
    %v145 = vlaneseq
    %v146 = vshrl.u32 %v145, 7
    %v147 = vsub.s32 5, %v146
    %v148 = vrot.slane %v121, %v147
    %v149 = vlaneseq
    %v150 = vshrl.u32 %v149, 7
    %v151 = vsub.s32 6, %v150
    %v152 = vrot.slane %v121, %v151
    %v153 = vlaneseq
    %v154 = vshrl.u32 %v153, 7
    %v155 = vsub.s32 7, %v154
    %v156 = vrot.slane %v121, %v155
    %v157 = vlaneseq
    %v158 = vshrl.u32 %v157, 7
    %v159 = vsub.s32 0, %v158
    %v160 = vrot.slane %v122, %v159
    %v161 = vlaneseq
    %v162 = vshrl.u32 %v161, 7
    %v163 = vsub.s32 1, %v162
    %v164 = vrot.slane %v122, %v163
    %v165 = vlaneseq
    %v166 = vshrl.u32 %v165, 7
    %v167 = vsub.s32 2, %v166
    %v168 = vrot.slane %v122, %v167
    %v169 = vlaneseq
    %v170 = vshrl.u32 %v169, 7
    %v171 = vsub.s32 3, %v170
    %v172 = vrot.slane %v122, %v171
    %vm185 = vcmask 261120
    %v187 = vsel %vm185, %v72, 0
    %189 = vmatprep.subr.mxu0 0.0
    %190 = vmatpush1.msra.mxu0 0.0
    %191 = vmatprep.subr.mxu0 0.0
    %192 = vmatpush1.msra.mxu0 0.0
    %193 = vmatprep.subr.mxu0 0.0
    %194 = vmatpush1.msra.mxu0 0.0
    %195 = vmatprep.subr.mxu0 0.0
    %196 = vmatpush1.msra.mxu0 0.0
    %197 = vmatprep.subr.mxu0 0.0
    %198 = vmatpush1.msra.mxu0 0.0
    %199 = vmatprep.subr.mxu0 0.0
    %200 = vmatpush1.msra.mxu0 0.0
    %201 = vmatprep.subr.mxu0 0.0
    %202 = vmatpush1.msra.mxu0 0.0
    %203 = vmatprep.subr.mxu0 0.0
    %204 = vmatpush1.msra.mxu0 0.0
    %205 = vmatprep.subr.mxu0 0.0
    %206 = vmatpush1.msra.mxu0 0.0
    %207 = vmatprep.subr.mxu0 0.0
    %208 = vmatpush1.msra.mxu0 0.0
    %209 = vmatprep.subr.mxu0 0.0
    %210 = vmatpush1.msra.mxu0 0.0
    %211 = vmatprep.subr.mxu0 0.0
    %212 = vmatpush1.msra.mxu0 0.0
    %213 = vmatprep.subr.mxu0 %v110
    %214 = vmatpush1.msra.mxu0 %v109
    %215 = vmatprep.subr.mxu0 %v98
    %216 = vmatpush1.msra.mxu0 %v97
    %217 = vmatprep.subr.mxu0 %v86
    %218 = vmatpush1.msra.mxu0 %v85
    %219 = vmatprep.subr.mxu0 %v74
    %220 = vmatpush1.msra.mxu0 %v73
    %221 = vmatprep.subr.mxu0 0.0
    %222 = vmatpush2.msra.mxu0 0.0
    %223 = vmatprep.subr.mxu0 0.0
    %224 = vmatpush2.msra.mxu0 0.0
    %225 = vmatprep.subr.mxu0 0.0
    %226 = vmatpush2.msra.mxu0 0.0
    %227 = vmatprep.subr.mxu0 0.0
    %228 = vmatpush2.msra.mxu0 0.0
    %229 = vmatprep.subr.mxu0 0.0
    %230 = vmatpush2.msra.mxu0 0.0
    %231 = vmatprep.subr.mxu0 0.0
    %232 = vmatpush2.msra.mxu0 0.0
    %233 = vmatprep.subr.mxu0 0.0
    %234 = vmatpush2.msra.mxu0 0.0
    %235 = vmatprep.subr.mxu0 0.0
    %236 = vmatpush2.msra.mxu0 0.0
    %237 = vmatprep.subr.mxu0 0.0
    %238 = vmatpush2.msra.mxu0 0.0
    %239 = vmatprep.subr.mxu0 0.0
    %240 = vmatpush2.msra.mxu0 0.0
    %241 = vmatprep.subr.mxu0 0.0
    %242 = vmatpush2.msra.mxu0 0.0
    %243 = vmatprep.subr.mxu0 0.0
    %244 = vmatpush2.msra.mxu0 0.0
    %245 = vmatprep.subr.mxu0 0.0
    %246 = vmatpush2.msra.mxu0 0.0
    %247 = vmatprep.subr.mxu0 0.0
    %248 = vmatpush2.msra.mxu0 0.0
    %249 = vmatprep.subr.mxu0 0.0
    %250 = vmatpush2.msra.mxu0 0.0
    %251 = vmatprep.subr.mxu0 0.0
    %252 = vmatpush2.msra.mxu0 0.0
    %253 = vmatprep.mubr.f32.mxu0 0.0
    %254 = vmatmul.mubr.f32.gmra.mxu0 %v187
    %v255 = vpop.f32.mrf.mxu0
    %v256 = vadd.f32 %v128, %v255
    %v257 = vpop.f32.mrf.mxu0
    %v258 = vadd.f32 %v132, %v257
    %259 = vdwg.mxu0
    %260 = vmatprep.subr.mxu0 0.0
    %261 = vmatpush1.msra.mxu0 0.0
    %262 = vmatprep.subr.mxu0 0.0
    %263 = vmatpush1.msra.mxu0 0.0
    %264 = vmatprep.subr.mxu0 0.0
    %265 = vmatpush1.msra.mxu0 0.0
    %266 = vmatprep.subr.mxu0 0.0
    %267 = vmatpush1.msra.mxu0 0.0
    %268 = vmatprep.subr.mxu0 0.0
    %269 = vmatpush1.msra.mxu0 0.0
    %270 = vmatprep.subr.mxu0 0.0
    %271 = vmatpush1.msra.mxu0 0.0
    %272 = vmatprep.subr.mxu0 0.0
    %273 = vmatpush1.msra.mxu0 0.0
    %274 = vmatprep.subr.mxu0 0.0
    %275 = vmatpush1.msra.mxu0 0.0
    %276 = vmatprep.subr.mxu0 0.0
    %277 = vmatpush1.msra.mxu0 0.0
    %278 = vmatprep.subr.mxu0 0.0
    %279 = vmatpush1.msra.mxu0 0.0
    %280 = vmatprep.subr.mxu0 0.0
    %281 = vmatpush1.msra.mxu0 0.0
    %282 = vmatprep.subr.mxu0 0.0
    %283 = vmatpush1.msra.mxu0 0.0
    %284 = vmatprep.subr.mxu0 %v112
    %285 = vmatpush1.msra.mxu0 %v111
    %286 = vmatprep.subr.mxu0 %v100
    %287 = vmatpush1.msra.mxu0 %v99
    %288 = vmatprep.subr.mxu0 %v88
    %289 = vmatpush1.msra.mxu0 %v87
    %290 = vmatprep.subr.mxu0 %v76
    %291 = vmatpush1.msra.mxu0 %v75
    %292 = vmatprep.subr.mxu0 0.0
    %293 = vmatpush2.msra.mxu0 0.0
    %294 = vmatprep.subr.mxu0 0.0
    %295 = vmatpush2.msra.mxu0 0.0
    %296 = vmatprep.subr.mxu0 0.0
    %297 = vmatpush2.msra.mxu0 0.0
    %298 = vmatprep.subr.mxu0 0.0
    %299 = vmatpush2.msra.mxu0 0.0
    %300 = vmatprep.subr.mxu0 0.0
    %301 = vmatpush2.msra.mxu0 0.0
    %302 = vmatprep.subr.mxu0 0.0
    %303 = vmatpush2.msra.mxu0 0.0
    %304 = vmatprep.subr.mxu0 0.0
    %305 = vmatpush2.msra.mxu0 0.0
    %306 = vmatprep.subr.mxu0 0.0
    %307 = vmatpush2.msra.mxu0 0.0
    %308 = vmatprep.subr.mxu0 0.0
    %309 = vmatpush2.msra.mxu0 0.0
    %310 = vmatprep.subr.mxu0 0.0
    %311 = vmatpush2.msra.mxu0 0.0
    %312 = vmatprep.subr.mxu0 0.0
    %313 = vmatpush2.msra.mxu0 0.0
    %314 = vmatprep.subr.mxu0 0.0
    %315 = vmatpush2.msra.mxu0 0.0
    %316 = vmatprep.subr.mxu0 0.0
    %317 = vmatpush2.msra.mxu0 0.0
    %318 = vmatprep.subr.mxu0 0.0
    %319 = vmatpush2.msra.mxu0 0.0
    %320 = vmatprep.subr.mxu0 0.0
    %321 = vmatpush2.msra.mxu0 0.0
    %322 = vmatprep.subr.mxu0 0.0
    %323 = vmatpush2.msra.mxu0 0.0
    %324 = vmatprep.mubr.f32.mxu0 0.0
    %325 = vmatmul.mubr.f32.gmra.mxu0 %v187
    %v326 = vpop.f32.mrf.mxu0
    %v327 = vadd.f32 %v136, %v326
    %v328 = vpop.f32.mrf.mxu0
    %v329 = vadd.f32 %v140, %v328
    %330 = vdwg.mxu0
    %331 = vmatprep.subr.mxu0 0.0
    %332 = vmatpush1.msra.mxu0 0.0
    %333 = vmatprep.subr.mxu0 0.0
    %334 = vmatpush1.msra.mxu0 0.0
    %335 = vmatprep.subr.mxu0 0.0
    %336 = vmatpush1.msra.mxu0 0.0
    %337 = vmatprep.subr.mxu0 0.0
    %338 = vmatpush1.msra.mxu0 0.0
    %339 = vmatprep.subr.mxu0 0.0
    %340 = vmatpush1.msra.mxu0 0.0
    %341 = vmatprep.subr.mxu0 0.0
    %342 = vmatpush1.msra.mxu0 0.0
    %343 = vmatprep.subr.mxu0 0.0
    %344 = vmatpush1.msra.mxu0 0.0
    %345 = vmatprep.subr.mxu0 0.0
    %346 = vmatpush1.msra.mxu0 0.0
    %347 = vmatprep.subr.mxu0 0.0
    %348 = vmatpush1.msra.mxu0 0.0
    %349 = vmatprep.subr.mxu0 0.0
    %350 = vmatpush1.msra.mxu0 0.0
    %351 = vmatprep.subr.mxu0 0.0
    %352 = vmatpush1.msra.mxu0 0.0
    %353 = vmatprep.subr.mxu0 0.0
    %354 = vmatpush1.msra.mxu0 0.0
    %355 = vmatprep.subr.mxu0 %v114
    %356 = vmatpush1.msra.mxu0 %v113
    %357 = vmatprep.subr.mxu0 %v102
    %358 = vmatpush1.msra.mxu0 %v101
    %359 = vmatprep.subr.mxu0 %v90
    %360 = vmatpush1.msra.mxu0 %v89
    %361 = vmatprep.subr.mxu0 %v78
    %362 = vmatpush1.msra.mxu0 %v77
    %363 = vmatprep.subr.mxu0 0.0
    %364 = vmatpush2.msra.mxu0 0.0
    %365 = vmatprep.subr.mxu0 0.0
    %366 = vmatpush2.msra.mxu0 0.0
    %367 = vmatprep.subr.mxu0 0.0
    %368 = vmatpush2.msra.mxu0 0.0
    %369 = vmatprep.subr.mxu0 0.0
    %370 = vmatpush2.msra.mxu0 0.0
    %371 = vmatprep.subr.mxu0 0.0
    %372 = vmatpush2.msra.mxu0 0.0
    %373 = vmatprep.subr.mxu0 0.0
    %374 = vmatpush2.msra.mxu0 0.0
    %375 = vmatprep.subr.mxu0 0.0
    %376 = vmatpush2.msra.mxu0 0.0
    %377 = vmatprep.subr.mxu0 0.0
    %378 = vmatpush2.msra.mxu0 0.0
    %379 = vmatprep.subr.mxu0 0.0
    %380 = vmatpush2.msra.mxu0 0.0
    %381 = vmatprep.subr.mxu0 0.0
    %382 = vmatpush2.msra.mxu0 0.0
    %383 = vmatprep.subr.mxu0 0.0
    %384 = vmatpush2.msra.mxu0 0.0
    %385 = vmatprep.subr.mxu0 0.0
    %386 = vmatpush2.msra.mxu0 0.0
    %387 = vmatprep.subr.mxu0 0.0
    %388 = vmatpush2.msra.mxu0 0.0
    %389 = vmatprep.subr.mxu0 0.0
    %390 = vmatpush2.msra.mxu0 0.0
    %391 = vmatprep.subr.mxu0 0.0
    %392 = vmatpush2.msra.mxu0 0.0
    %393 = vmatprep.subr.mxu0 0.0
    %394 = vmatpush2.msra.mxu0 0.0
    %395 = vmatprep.mubr.f32.mxu0 0.0
    %396 = vmatmul.mubr.f32.gmra.mxu0 %v187
    %v397 = vpop.f32.mrf.mxu0
    %v398 = vadd.f32 %v144, %v397
    %v399 = vpop.f32.mrf.mxu0
    %v400 = vadd.f32 %v148, %v399
    %401 = vdwg.mxu0
    %402 = vmatprep.subr.mxu0 0.0
    %403 = vmatpush1.msra.mxu0 0.0
    %404 = vmatprep.subr.mxu0 0.0
    %405 = vmatpush1.msra.mxu0 0.0
    %406 = vmatprep.subr.mxu0 0.0
    %407 = vmatpush1.msra.mxu0 0.0
    %408 = vmatprep.subr.mxu0 0.0
    %409 = vmatpush1.msra.mxu0 0.0
    %410 = vmatprep.subr.mxu0 0.0
    %411 = vmatpush1.msra.mxu0 0.0
    %412 = vmatprep.subr.mxu0 0.0
    %413 = vmatpush1.msra.mxu0 0.0
    %414 = vmatprep.subr.mxu0 0.0
    %415 = vmatpush1.msra.mxu0 0.0
    %416 = vmatprep.subr.mxu0 0.0
    %417 = vmatpush1.msra.mxu0 0.0
    %418 = vmatprep.subr.mxu0 0.0
    %419 = vmatpush1.msra.mxu0 0.0
    %420 = vmatprep.subr.mxu0 0.0
    %421 = vmatpush1.msra.mxu0 0.0
    %422 = vmatprep.subr.mxu0 0.0
    %423 = vmatpush1.msra.mxu0 0.0
    %424 = vmatprep.subr.mxu0 0.0
    %425 = vmatpush1.msra.mxu0 0.0
    %426 = vmatprep.subr.mxu0 %v116
    %427 = vmatpush1.msra.mxu0 %v115
    %428 = vmatprep.subr.mxu0 %v104
    %429 = vmatpush1.msra.mxu0 %v103
    %430 = vmatprep.subr.mxu0 %v92
    %431 = vmatpush1.msra.mxu0 %v91
    %432 = vmatprep.subr.mxu0 %v80
    %433 = vmatpush1.msra.mxu0 %v79
    %434 = vmatprep.subr.mxu0 0.0
    %435 = vmatpush2.msra.mxu0 0.0
    %436 = vmatprep.subr.mxu0 0.0
    %437 = vmatpush2.msra.mxu0 0.0
    %438 = vmatprep.subr.mxu0 0.0
    %439 = vmatpush2.msra.mxu0 0.0
    %440 = vmatprep.subr.mxu0 0.0
    %441 = vmatpush2.msra.mxu0 0.0
    %442 = vmatprep.subr.mxu0 0.0
    %443 = vmatpush2.msra.mxu0 0.0
    %444 = vmatprep.subr.mxu0 0.0
    %445 = vmatpush2.msra.mxu0 0.0
    %446 = vmatprep.subr.mxu0 0.0
    %447 = vmatpush2.msra.mxu0 0.0
    %448 = vmatprep.subr.mxu0 0.0
    %449 = vmatpush2.msra.mxu0 0.0
    %450 = vmatprep.subr.mxu0 0.0
    %451 = vmatpush2.msra.mxu0 0.0
    %452 = vmatprep.subr.mxu0 0.0
    %453 = vmatpush2.msra.mxu0 0.0
    %454 = vmatprep.subr.mxu0 0.0
    %455 = vmatpush2.msra.mxu0 0.0
    %456 = vmatprep.subr.mxu0 0.0
    %457 = vmatpush2.msra.mxu0 0.0
    %458 = vmatprep.subr.mxu0 0.0
    %459 = vmatpush2.msra.mxu0 0.0
    %460 = vmatprep.subr.mxu0 0.0
    %461 = vmatpush2.msra.mxu0 0.0
    %462 = vmatprep.subr.mxu0 0.0
    %463 = vmatpush2.msra.mxu0 0.0
    %464 = vmatprep.subr.mxu0 0.0
    %465 = vmatpush2.msra.mxu0 0.0
    %466 = vmatprep.mubr.f32.mxu0 0.0
    %467 = vmatmul.mubr.f32.gmra.mxu0 %v187
    %v468 = vpop.f32.mrf.mxu0
    %v469 = vadd.f32 %v152, %v468
    %v470 = vpop.f32.mrf.mxu0
    %v471 = vadd.f32 %v156, %v470
    %472 = vdwg.mxu0
    %473 = vmatprep.subr.mxu0 0.0
    %474 = vmatpush1.msra.mxu0 0.0
    %475 = vmatprep.subr.mxu0 0.0
    %476 = vmatpush1.msra.mxu0 0.0
    %477 = vmatprep.subr.mxu0 0.0
    %478 = vmatpush1.msra.mxu0 0.0
    %479 = vmatprep.subr.mxu0 0.0
    %480 = vmatpush1.msra.mxu0 0.0
    %481 = vmatprep.subr.mxu0 0.0
    %482 = vmatpush1.msra.mxu0 0.0
    %483 = vmatprep.subr.mxu0 0.0
    %484 = vmatpush1.msra.mxu0 0.0
    %485 = vmatprep.subr.mxu0 0.0
    %486 = vmatpush1.msra.mxu0 0.0
    %487 = vmatprep.subr.mxu0 0.0
    %488 = vmatpush1.msra.mxu0 0.0
    %489 = vmatprep.subr.mxu0 0.0
    %490 = vmatpush1.msra.mxu0 0.0
    %491 = vmatprep.subr.mxu0 0.0
    %492 = vmatpush1.msra.mxu0 0.0
    %493 = vmatprep.subr.mxu0 0.0
    %494 = vmatpush1.msra.mxu0 0.0
    %495 = vmatprep.subr.mxu0 0.0
    %496 = vmatpush1.msra.mxu0 0.0
    %497 = vmatprep.subr.mxu0 %v118
    %498 = vmatpush1.msra.mxu0 %v117
    %499 = vmatprep.subr.mxu0 %v106
    %500 = vmatpush1.msra.mxu0 %v105
    %501 = vmatprep.subr.mxu0 %v94
    %502 = vmatpush1.msra.mxu0 %v93
    %503 = vmatprep.subr.mxu0 %v82
    %504 = vmatpush1.msra.mxu0 %v81
    %505 = vmatprep.subr.mxu0 0.0
    %506 = vmatpush2.msra.mxu0 0.0
    %507 = vmatprep.subr.mxu0 0.0
    %508 = vmatpush2.msra.mxu0 0.0
    %509 = vmatprep.subr.mxu0 0.0
    %510 = vmatpush2.msra.mxu0 0.0
    %511 = vmatprep.subr.mxu0 0.0
    %512 = vmatpush2.msra.mxu0 0.0
    %513 = vmatprep.subr.mxu0 0.0
    %514 = vmatpush2.msra.mxu0 0.0
    %515 = vmatprep.subr.mxu0 0.0
    %516 = vmatpush2.msra.mxu0 0.0
    %517 = vmatprep.subr.mxu0 0.0
    %518 = vmatpush2.msra.mxu0 0.0
    %519 = vmatprep.subr.mxu0 0.0
    %520 = vmatpush2.msra.mxu0 0.0
    %521 = vmatprep.subr.mxu0 0.0
    %522 = vmatpush2.msra.mxu0 0.0
    %523 = vmatprep.subr.mxu0 0.0
    %524 = vmatpush2.msra.mxu0 0.0
    %525 = vmatprep.subr.mxu0 0.0
    %526 = vmatpush2.msra.mxu0 0.0
    %527 = vmatprep.subr.mxu0 0.0
    %528 = vmatpush2.msra.mxu0 0.0
    %529 = vmatprep.subr.mxu0 0.0
    %530 = vmatpush2.msra.mxu0 0.0
    %531 = vmatprep.subr.mxu0 0.0
    %532 = vmatpush2.msra.mxu0 0.0
    %533 = vmatprep.subr.mxu0 0.0
    %534 = vmatpush2.msra.mxu0 0.0
    %535 = vmatprep.subr.mxu0 0.0
    %536 = vmatpush2.msra.mxu0 0.0
    %537 = vmatprep.mubr.f32.mxu0 0.0
    %538 = vmatmul.mubr.f32.gmra.mxu0 %v187
    %v539 = vpop.f32.mrf.mxu0
    %v540 = vadd.f32 %v160, %v539
    %v541 = vpop.f32.mrf.mxu0
    %v542 = vadd.f32 %v164, %v541
    %543 = vdwg.mxu0
    %544 = vmatprep.subr.mxu0 0.0
    %545 = vmatpush1.msra.mxu0 0.0
    %546 = vmatprep.subr.mxu0 0.0
    %547 = vmatpush1.msra.mxu0 0.0
    %548 = vmatprep.subr.mxu0 0.0
    %549 = vmatpush1.msra.mxu0 0.0
    %550 = vmatprep.subr.mxu0 0.0
    %551 = vmatpush1.msra.mxu0 0.0
    %552 = vmatprep.subr.mxu0 0.0
    %553 = vmatpush1.msra.mxu0 0.0
    %554 = vmatprep.subr.mxu0 0.0
    %555 = vmatpush1.msra.mxu0 0.0
    %556 = vmatprep.subr.mxu0 0.0
    %557 = vmatpush1.msra.mxu0 0.0
    %558 = vmatprep.subr.mxu0 0.0
    %559 = vmatpush1.msra.mxu0 0.0
    %560 = vmatprep.subr.mxu0 0.0
    %561 = vmatpush1.msra.mxu0 0.0
    %562 = vmatprep.subr.mxu0 0.0
    %563 = vmatpush1.msra.mxu0 0.0
    %564 = vmatprep.subr.mxu0 0.0
    %565 = vmatpush1.msra.mxu0 0.0
    %566 = vmatprep.subr.mxu0 0.0
    %567 = vmatpush1.msra.mxu0 0.0
    %568 = vmatprep.subr.mxu0 %v120
    %569 = vmatpush1.msra.mxu0 %v119
    %570 = vmatprep.subr.mxu0 %v108
    %571 = vmatpush1.msra.mxu0 %v107
    %572 = vmatprep.subr.mxu0 %v96
    %573 = vmatpush1.msra.mxu0 %v95
    %574 = vmatprep.subr.mxu0 %v84
    %575 = vmatpush1.msra.mxu0 %v83
    %576 = vmatprep.subr.mxu0 0.0
    %577 = vmatpush2.msra.mxu0 0.0
    %578 = vmatprep.subr.mxu0 0.0
    %579 = vmatpush2.msra.mxu0 0.0
    %580 = vmatprep.subr.mxu0 0.0
    %581 = vmatpush2.msra.mxu0 0.0
    %582 = vmatprep.subr.mxu0 0.0
    %583 = vmatpush2.msra.mxu0 0.0
    %584 = vmatprep.subr.mxu0 0.0
    %585 = vmatpush2.msra.mxu0 0.0
    %586 = vmatprep.subr.mxu0 0.0
    %587 = vmatpush2.msra.mxu0 0.0
    %588 = vmatprep.subr.mxu0 0.0
    %589 = vmatpush2.msra.mxu0 0.0
    %590 = vmatprep.subr.mxu0 0.0
    %591 = vmatpush2.msra.mxu0 0.0
    %592 = vmatprep.subr.mxu0 0.0
    %593 = vmatpush2.msra.mxu0 0.0
    %594 = vmatprep.subr.mxu0 0.0
    %595 = vmatpush2.msra.mxu0 0.0
    %596 = vmatprep.subr.mxu0 0.0
    %597 = vmatpush2.msra.mxu0 0.0
    %598 = vmatprep.subr.mxu0 0.0
    %599 = vmatpush2.msra.mxu0 0.0
    %600 = vmatprep.subr.mxu0 0.0
    %601 = vmatpush2.msra.mxu0 0.0
    %602 = vmatprep.subr.mxu0 0.0
    %603 = vmatpush2.msra.mxu0 0.0
    %604 = vmatprep.subr.mxu0 0.0
    %605 = vmatpush2.msra.mxu0 0.0
    %606 = vmatprep.subr.mxu0 0.0
    %607 = vmatpush2.msra.mxu0 0.0
    %608 = vmatprep.mubr.f32.mxu0 0.0
    %609 = vmatmul.mubr.f32.gmra.mxu0 %v187
    %v610 = vpop.f32.mrf.mxu0
    %v611 = vadd.f32 %v168, %v610
    %v612 = vpop.f32.mrf.mxu0
    %v613 = vadd.f32 %v172, %v612
    %614 = vdwg.mxu0
    %v615 = vmax.f32 %v256, 0.0
    %v616 = vmax.f32 %v258, 0.0
    %v617 = vmax.f32 %v327, 0.0
    %v618 = vmax.f32 %v329, 0.0
    %v619 = vmax.f32 %v398, 0.0
    %v620 = vmax.f32 %v400, 0.0
    %v621 = vmax.f32 %v469, 0.0
    %v622 = vmax.f32 %v471, 0.0
    %v623 = vmax.f32 %v540, 0.0
    %v624 = vmax.f32 %v542, 0.0
    %v625 = vmax.f32 %v611, 0.0
    %v626 = vmax.f32 %v613, 0.0
    %v627 = vld [vmem:[#allocation8] sm:$0xff]
    %v628 = vld [vmem:[#allocation8 + $0x8] sm:$0xff]
    %v629 = vld [vmem:[#allocation8 + $0x10] sm:$0xff]
    %v630 = vld [vmem:[#allocation8 + $0x18] sm:$0xff]
    %v631 = vld [vmem:[#allocation8 + $0x20] sm:$0xff]
    %v632 = vld [vmem:[#allocation8 + $0x28] sm:$0xff]
    %v633 = vld [vmem:[#allocation8 + $0x30] sm:$0xff]
    %v634 = vld [vmem:[#allocation8 + $0x38] sm:$0xff]
    %v635 = vld [vmem:[#allocation8 + $0x40] sm:$0xff]
    %v636 = vld [vmem:[#allocation8 + $0x48] sm:$0xff]
    %v637 = vld [vmem:[#allocation8 + $0x50] sm:$0xff]
    %v638 = vld [vmem:[#allocation8 + $0x58] sm:$0xff]
    %v639 = vld [vmem:[#allocation8 + $0x60] sm:$0xff]
    %v640 = vld [vmem:[#allocation8 + $0x68] sm:$0xff]
    %v641 = vld [vmem:[#allocation8 + $0x70] sm:$0xff]
    %v642 = vld [vmem:[#allocation8 + $0x78] sm:$0xff]
    %v643 = vld [vmem:[#allocation8 + $0x80] sm:$0xff]
    %v644 = vld [vmem:[#allocation8 + $0x88] sm:$0xff]
    %v645 = vld [vmem:[#allocation8 + $0x90] sm:$0xff]
    %v646 = vld [vmem:[#allocation8 + $0x98] sm:$0xff]
    %v647 = vld [vmem:[#allocation8 + $0xa0] sm:$0xff]
    %v648 = vld [vmem:[#allocation8 + $0xa8] sm:$0xff]
    %v649 = vld [vmem:[#allocation8 + $0xb0] sm:$0xff]
    %v650 = vld [vmem:[#allocation8 + $0xb8] sm:$0xff]
    %v651 = vld [vmem:[#allocation8 + $0xc0] sm:$0xff]
    %v652 = vld [vmem:[#allocation8 + $0xc8] sm:$0xff]
    %v653 = vld [vmem:[#allocation8 + $0xd0] sm:$0xff]
    %v654 = vld [vmem:[#allocation8 + $0xd8] sm:$0xff]
    %v655 = vld [vmem:[#allocation8 + $0xe0] sm:$0xff]
    %v656 = vld [vmem:[#allocation8 + $0xe8] sm:$0xff]
    %v657 = vld [vmem:[#allocation8 + $0xf0] sm:$0xff]
    %v658 = vld [vmem:[#allocation8 + $0xf8] sm:$0xff]
    %v659 = vld [vmem:[#allocation8 + $0x100] sm:$0xff]
    %v660 = vld [vmem:[#allocation8 + $0x108] sm:$0xff]
    %v661 = vld [vmem:[#allocation8 + $0x110] sm:$0xff]
    %v662 = vld [vmem:[#allocation8 + $0x118] sm:$0xff]
    %v663 = vld [vmem:[#allocation8 + $0x120] sm:$0xff]
    %v664 = vld [vmem:[#allocation8 + $0x128] sm:$0xff]
    %v665 = vld [vmem:[#allocation8 + $0x130] sm:$0xff]
    %v666 = vld [vmem:[#allocation8 + $0x138] sm:$0xff]
    %v667 = vld [vmem:[#allocation8 + $0x140] sm:$0xff]
    %v668 = vld [vmem:[#allocation8 + $0x148] sm:$0xff]
    %v669 = vld [vmem:[#allocation8 + $0x150] sm:$0xff]
    %v670 = vld [vmem:[#allocation8 + $0x158] sm:$0xff]
    %v671 = vld [vmem:[#allocation8 + $0x160] sm:$0xff]
    %v672 = vld [vmem:[#allocation8 + $0x168] sm:$0xff]
    %v673 = vld [vmem:[#allocation8 + $0x170] sm:$0xff]
    %v674 = vld [vmem:[#allocation8 + $0x178] sm:$0xff]
    %v675 = vld [vmem:[#allocation8 + $0x180] sm:$0xff]
    %v676 = vld [vmem:[#allocation8 + $0x188] sm:$0xff]
    %v677 = vld [vmem:[#allocation8 + $0x190] sm:$0xff]
    %v678 = vld [vmem:[#allocation8 + $0x198] sm:$0xff]
    %v679 = vld [vmem:[#allocation8 + $0x1a0] sm:$0xff]
    %v680 = vld [vmem:[#allocation8 + $0x1a8] sm:$0xff]
    %v681 = vld [vmem:[#allocation8 + $0x1b0] sm:$0xff]
    %v682 = vld [vmem:[#allocation8 + $0x1b8] sm:$0xff]
    %v683 = vld [vmem:[#allocation8 + $0x1c0] sm:$0xff]
    %v684 = vld [vmem:[#allocation8 + $0x1c8] sm:$0xff]
    %v685 = vld [vmem:[#allocation8 + $0x1d0] sm:$0xff]
    %v686 = vld [vmem:[#allocation8 + $0x1d8] sm:$0xff]
    %v687 = vld [vmem:[#allocation8 + $0x1e0] sm:$0xff]
    %v688 = vld [vmem:[#allocation8 + $0x1e8] sm:$0xff]
    %v689 = vld [vmem:[#allocation8 + $0x1f0] sm:$0xff]
    %v690 = vld [vmem:[#allocation8 + $0x1f8] sm:$0xff]
    %v691 = vld [vmem:[%s4] sm:$0x1]
    %v693 = vlaneseq
    %v694 = vshrl.u32 %v693, 7
    %v695 = vsub.s32 0, %v694
    %v696 = vrot.slane %v691, %v695
    %698 = vmatprep.subr.mxu0 0.0
    %699 = vmatpush1.msra.mxu0 %v642
    %700 = vmatprep.subr.mxu0 0.0
    %701 = vmatpush1.msra.mxu0 %v641
    %702 = vmatprep.subr.mxu0 0.0
    %703 = vmatpush1.msra.mxu0 %v640
    %704 = vmatprep.subr.mxu0 0.0
    %705 = vmatpush1.msra.mxu0 %v639
    %706 = vmatprep.subr.mxu0 0.0
    %707 = vmatpush1.msra.mxu0 %v638
    %708 = vmatprep.subr.mxu0 0.0
    %709 = vmatpush1.msra.mxu0 %v637
    %710 = vmatprep.subr.mxu0 0.0
    %711 = vmatpush1.msra.mxu0 %v636
    %712 = vmatprep.subr.mxu0 0.0
    %713 = vmatpush1.msra.mxu0 %v635
    %714 = vmatprep.subr.mxu0 0.0
    %715 = vmatpush1.msra.mxu0 %v634
    %716 = vmatprep.subr.mxu0 0.0
    %717 = vmatpush1.msra.mxu0 %v633
    %718 = vmatprep.subr.mxu0 0.0
    %719 = vmatpush1.msra.mxu0 %v632
    %720 = vmatprep.subr.mxu0 0.0
    %721 = vmatpush1.msra.mxu0 %v631
    %722 = vmatprep.subr.mxu0 0.0
    %723 = vmatpush1.msra.mxu0 %v630
    %724 = vmatprep.subr.mxu0 0.0
    %725 = vmatpush1.msra.mxu0 %v629
    %726 = vmatprep.subr.mxu0 0.0
    %727 = vmatpush1.msra.mxu0 %v628
    %728 = vmatprep.subr.mxu0 0.0
    %729 = vmatpush1.msra.mxu0 %v627
    %730 = vmatprep.subr.mxu0 0.0
    %731 = vmatpush2.msra.mxu0 %v658
    %732 = vmatprep.subr.mxu0 0.0
    %733 = vmatpush2.msra.mxu0 %v657
    %734 = vmatprep.subr.mxu0 0.0
    %735 = vmatpush2.msra.mxu0 %v656
    %736 = vmatprep.subr.mxu0 0.0
    %737 = vmatpush2.msra.mxu0 %v655
    %738 = vmatprep.subr.mxu0 0.0
    %739 = vmatpush2.msra.mxu0 %v654
    %740 = vmatprep.subr.mxu0 0.0
    %741 = vmatpush2.msra.mxu0 %v653
    %742 = vmatprep.subr.mxu0 0.0
    %743 = vmatpush2.msra.mxu0 %v652
    %744 = vmatprep.subr.mxu0 0.0
    %745 = vmatpush2.msra.mxu0 %v651
    %746 = vmatprep.subr.mxu0 0.0
    %747 = vmatpush2.msra.mxu0 %v650
    %748 = vmatprep.subr.mxu0 0.0
    %749 = vmatpush2.msra.mxu0 %v649
    %750 = vmatprep.subr.mxu0 0.0
    %751 = vmatpush2.msra.mxu0 %v648
    %752 = vmatprep.subr.mxu0 0.0
    %753 = vmatpush2.msra.mxu0 %v647
    %754 = vmatprep.subr.mxu0 0.0
    %755 = vmatpush2.msra.mxu0 %v646
    %756 = vmatprep.subr.mxu0 0.0
    %757 = vmatpush2.msra.mxu0 %v645
    %758 = vmatprep.subr.mxu0 0.0
    %759 = vmatpush2.msra.mxu0 %v644
    %760 = vmatprep.subr.mxu0 0.0
    %761 = vmatpush2.msra.mxu0 %v643
    %762 = vmatprep.mubr.f32.mxu0 %v616
    %763 = vmatmul.mubr.f32.gmra.mxu0 %v615
    %v764 = vpop.f32.mrf.mxu0
    %v765 = vadd.f32 %v696, %v764
    %v766 = vpop.f32.mrf.mxu0
    %767 = vdwg.mxu0
    %768 = vmatprep.subr.mxu0 0.0
    %769 = vmatpush1.msra.mxu0 %v674
    %770 = vmatprep.subr.mxu0 0.0
    %771 = vmatpush1.msra.mxu0 %v673
    %772 = vmatprep.subr.mxu0 0.0
    %773 = vmatpush1.msra.mxu0 %v672
    %774 = vmatprep.subr.mxu0 0.0
    %775 = vmatpush1.msra.mxu0 %v671
    %776 = vmatprep.subr.mxu0 0.0
    %777 = vmatpush1.msra.mxu0 %v670
    %778 = vmatprep.subr.mxu0 0.0
    %779 = vmatpush1.msra.mxu0 %v669
    %780 = vmatprep.subr.mxu0 0.0
    %781 = vmatpush1.msra.mxu0 %v668
    %782 = vmatprep.subr.mxu0 0.0
    %783 = vmatpush1.msra.mxu0 %v667
    %784 = vmatprep.subr.mxu0 0.0
    %785 = vmatpush1.msra.mxu0 %v666
    %786 = vmatprep.subr.mxu0 0.0
    %787 = vmatpush1.msra.mxu0 %v665
    %788 = vmatprep.subr.mxu0 0.0
    %789 = vmatpush1.msra.mxu0 %v664
    %790 = vmatprep.subr.mxu0 0.0
    %791 = vmatpush1.msra.mxu0 %v663
    %792 = vmatprep.subr.mxu0 0.0
    %793 = vmatpush1.msra.mxu0 %v662
    %794 = vmatprep.subr.mxu0 0.0
    %795 = vmatpush1.msra.mxu0 %v661
    %796 = vmatprep.subr.mxu0 0.0
    %797 = vmatpush1.msra.mxu0 %v660
    %798 = vmatprep.subr.mxu0 0.0
    %799 = vmatpush1.msra.mxu0 %v659
    %800 = vmatprep.subr.mxu0 0.0
    %801 = vmatpush2.msra.mxu0 %v690
    %802 = vmatprep.subr.mxu0 0.0
    %803 = vmatpush2.msra.mxu0 %v689
    %804 = vmatprep.subr.mxu0 0.0
    %805 = vmatpush2.msra.mxu0 %v688
    %806 = vmatprep.subr.mxu0 0.0
    %807 = vmatpush2.msra.mxu0 %v687
    %808 = vmatprep.subr.mxu0 0.0
    %809 = vmatpush2.msra.mxu0 %v686
    %810 = vmatprep.subr.mxu0 0.0
    %811 = vmatpush2.msra.mxu0 %v685
    %812 = vmatprep.subr.mxu0 0.0
    %813 = vmatpush2.msra.mxu0 %v684
    %814 = vmatprep.subr.mxu0 0.0
    %815 = vmatpush2.msra.mxu0 %v683
    %816 = vmatprep.subr.mxu0 0.0
    %817 = vmatpush2.msra.mxu0 %v682
    %818 = vmatprep.subr.mxu0 0.0
    %819 = vmatpush2.msra.mxu0 %v681
    %820 = vmatprep.subr.mxu0 0.0
    %821 = vmatpush2.msra.mxu0 %v680
    %822 = vmatprep.subr.mxu0 0.0
    %823 = vmatpush2.msra.mxu0 %v679
    %824 = vmatprep.subr.mxu0 0.0
    %825 = vmatpush2.msra.mxu0 %v678
    %826 = vmatprep.subr.mxu0 0.0
    %827 = vmatpush2.msra.mxu0 %v677
    %828 = vmatprep.subr.mxu0 0.0
    %829 = vmatpush2.msra.mxu0 %v676
    %830 = vmatprep.subr.mxu0 0.0
    %831 = vmatpush2.msra.mxu0 %v675
    %832 = vmatprep.mubr.f32.mxu0 %v618
    %833 = vmatmul.mubr.f32.gmra.mxu0 %v617
    %v834 = vpop.f32.mrf.mxu0
    %v835 = vadd.f32 %v765, %v834
    %v836 = vpop.f32.mrf.mxu0
    %837 = vdwg.mxu0
    %838 = vst [vmem:[#allocation10] sm:$0xff] %v835
    %s839 = scalar_lea.vmem [#allocation8], 512
    %v840 = vld [vmem:[%s839] sm:$0xff]
    %v841 = vld [vmem:[%s839 + $0x8] sm:$0xff]
    %v842 = vld [vmem:[%s839 + $0x10] sm:$0xff]
    %v843 = vld [vmem:[%s839 + $0x18] sm:$0xff]
    %v844 = vld [vmem:[%s839 + $0x20] sm:$0xff]
    %v845 = vld [vmem:[%s839 + $0x28] sm:$0xff]
    %v846 = vld [vmem:[%s839 + $0x30] sm:$0xff]
    %v847 = vld [vmem:[%s839 + $0x38] sm:$0xff]
    %v848 = vld [vmem:[%s839 + $0x40] sm:$0xff]
    %v849 = vld [vmem:[%s839 + $0x48] sm:$0xff]
    %v850 = vld [vmem:[%s839 + $0x50] sm:$0xff]
    %v851 = vld [vmem:[%s839 + $0x58] sm:$0xff]
    %v852 = vld [vmem:[%s839 + $0x60] sm:$0xff]
    %v853 = vld [vmem:[%s839 + $0x68] sm:$0xff]
    %v854 = vld [vmem:[%s839 + $0x70] sm:$0xff]
    %v855 = vld [vmem:[%s839 + $0x78] sm:$0xff]
    %v856 = vld [vmem:[%s839 + $0x80] sm:$0xff]
    %v857 = vld [vmem:[%s839 + $0x88] sm:$0xff]
    %v858 = vld [vmem:[%s839 + $0x90] sm:$0xff]
    %v859 = vld [vmem:[%s839 + $0x98] sm:$0xff]
    %v860 = vld [vmem:[%s839 + $0xa0] sm:$0xff]
    %v861 = vld [vmem:[%s839 + $0xa8] sm:$0xff]
    %v862 = vld [vmem:[%s839 + $0xb0] sm:$0xff]
    %v863 = vld [vmem:[%s839 + $0xb8] sm:$0xff]
    %v864 = vld [vmem:[%s839 + $0xc0] sm:$0xff]
    %v865 = vld [vmem:[%s839 + $0xc8] sm:$0xff]
    %v866 = vld [vmem:[%s839 + $0xd0] sm:$0xff]
    %v867 = vld [vmem:[%s839 + $0xd8] sm:$0xff]
    %v868 = vld [vmem:[%s839 + $0xe0] sm:$0xff]
    %v869 = vld [vmem:[%s839 + $0xe8] sm:$0xff]
    %v870 = vld [vmem:[%s839 + $0xf0] sm:$0xff]
    %v871 = vld [vmem:[%s839 + $0xf8] sm:$0xff]
    %v872 = vld [vmem:[%s839 + $0x100] sm:$0xff]
    %v873 = vld [vmem:[%s839 + $0x108] sm:$0xff]
    %v874 = vld [vmem:[%s839 + $0x110] sm:$0xff]
    %v875 = vld [vmem:[%s839 + $0x118] sm:$0xff]
    %v876 = vld [vmem:[%s839 + $0x120] sm:$0xff]
    %v877 = vld [vmem:[%s839 + $0x128] sm:$0xff]
    %v878 = vld [vmem:[%s839 + $0x130] sm:$0xff]
    %v879 = vld [vmem:[%s839 + $0x138] sm:$0xff]
    %v880 = vld [vmem:[%s839 + $0x140] sm:$0xff]
    %v881 = vld [vmem:[%s839 + $0x148] sm:$0xff]
    %v882 = vld [vmem:[%s839 + $0x150] sm:$0xff]
    %v883 = vld [vmem:[%s839 + $0x158] sm:$0xff]
    %v884 = vld [vmem:[%s839 + $0x160] sm:$0xff]
    %v885 = vld [vmem:[%s839 + $0x168] sm:$0xff]
    %v886 = vld [vmem:[%s839 + $0x170] sm:$0xff]
    %v887 = vld [vmem:[%s839 + $0x178] sm:$0xff]
    %v888 = vld [vmem:[%s839 + $0x180] sm:$0xff]
    %v889 = vld [vmem:[%s839 + $0x188] sm:$0xff]
    %v890 = vld [vmem:[%s839 + $0x190] sm:$0xff]
    %v891 = vld [vmem:[%s839 + $0x198] sm:$0xff]
    %v892 = vld [vmem:[%s839 + $0x1a0] sm:$0xff]
    %v893 = vld [vmem:[%s839 + $0x1a8] sm:$0xff]
    %v894 = vld [vmem:[%s839 + $0x1b0] sm:$0xff]
    %v895 = vld [vmem:[%s839 + $0x1b8] sm:$0xff]
    %v896 = vld [vmem:[%s839 + $0x1c0] sm:$0xff]
    %v897 = vld [vmem:[%s839 + $0x1c8] sm:$0xff]
    %v898 = vld [vmem:[%s839 + $0x1d0] sm:$0xff]
    %v899 = vld [vmem:[%s839 + $0x1d8] sm:$0xff]
    %v900 = vld [vmem:[%s839 + $0x1e0] sm:$0xff]
    %v901 = vld [vmem:[%s839 + $0x1e8] sm:$0xff]
    %v902 = vld [vmem:[%s839 + $0x1f0] sm:$0xff]
    %v903 = vld [vmem:[%s839 + $0x1f8] sm:$0xff]
    %s904 = scalar_lea.vmem %s4, 1
    %v905 = vld [vmem:[%s904] sm:$0x1]
    %v907 = vlaneseq
    %v908 = vshrl.u32 %v907, 7
    %v909 = vsub.s32 0, %v908
    %v910 = vrot.slane %v905, %v909
    %912 = vmatprep.subr.mxu0 0.0
    %913 = vmatpush1.msra.mxu0 %v855
    %914 = vmatprep.subr.mxu0 0.0
    %915 = vmatpush1.msra.mxu0 %v854
    %916 = vmatprep.subr.mxu0 0.0
    %917 = vmatpush1.msra.mxu0 %v853
    %918 = vmatprep.subr.mxu0 0.0
    %919 = vmatpush1.msra.mxu0 %v852
    %920 = vmatprep.subr.mxu0 0.0
    %921 = vmatpush1.msra.mxu0 %v851
    %922 = vmatprep.subr.mxu0 0.0
    %923 = vmatpush1.msra.mxu0 %v850
    %924 = vmatprep.subr.mxu0 0.0
    %925 = vmatpush1.msra.mxu0 %v849
    %926 = vmatprep.subr.mxu0 0.0
    %927 = vmatpush1.msra.mxu0 %v848
    %928 = vmatprep.subr.mxu0 0.0
    %929 = vmatpush1.msra.mxu0 %v847
    %930 = vmatprep.subr.mxu0 0.0
    %931 = vmatpush1.msra.mxu0 %v846
    %932 = vmatprep.subr.mxu0 0.0
    %933 = vmatpush1.msra.mxu0 %v845
    %934 = vmatprep.subr.mxu0 0.0
    %935 = vmatpush1.msra.mxu0 %v844
    %936 = vmatprep.subr.mxu0 0.0
    %937 = vmatpush1.msra.mxu0 %v843
    %938 = vmatprep.subr.mxu0 0.0
    %939 = vmatpush1.msra.mxu0 %v842
    %940 = vmatprep.subr.mxu0 0.0
    %941 = vmatpush1.msra.mxu0 %v841
    %942 = vmatprep.subr.mxu0 0.0
    %943 = vmatpush1.msra.mxu0 %v840
    %944 = vmatprep.subr.mxu0 0.0
    %945 = vmatpush2.msra.mxu0 %v871
    %946 = vmatprep.subr.mxu0 0.0
    %947 = vmatpush2.msra.mxu0 %v870
    %948 = vmatprep.subr.mxu0 0.0
    %949 = vmatpush2.msra.mxu0 %v869
    %950 = vmatprep.subr.mxu0 0.0
    %951 = vmatpush2.msra.mxu0 %v868
    %952 = vmatprep.subr.mxu0 0.0
    %953 = vmatpush2.msra.mxu0 %v867
    %954 = vmatprep.subr.mxu0 0.0
    %955 = vmatpush2.msra.mxu0 %v866
    %956 = vmatprep.subr.mxu0 0.0
    %957 = vmatpush2.msra.mxu0 %v865
    %958 = vmatprep.subr.mxu0 0.0
    %959 = vmatpush2.msra.mxu0 %v864
    %960 = vmatprep.subr.mxu0 0.0
    %961 = vmatpush2.msra.mxu0 %v863
    %962 = vmatprep.subr.mxu0 0.0
    %963 = vmatpush2.msra.mxu0 %v862
    %964 = vmatprep.subr.mxu0 0.0
    %965 = vmatpush2.msra.mxu0 %v861
    %966 = vmatprep.subr.mxu0 0.0
    %967 = vmatpush2.msra.mxu0 %v860
    %968 = vmatprep.subr.mxu0 0.0
    %969 = vmatpush2.msra.mxu0 %v859
    %970 = vmatprep.subr.mxu0 0.0
    %971 = vmatpush2.msra.mxu0 %v858
    %972 = vmatprep.subr.mxu0 0.0
    %973 = vmatpush2.msra.mxu0 %v857
    %974 = vmatprep.subr.mxu0 0.0
    %975 = vmatpush2.msra.mxu0 %v856
    %976 = vmatprep.mubr.f32.mxu0 %v620
    %977 = vmatmul.mubr.f32.gmra.mxu0 %v619
    %v978 = vpop.f32.mrf.mxu0
    %v979 = vadd.f32 %v910, %v978
    %v980 = vpop.f32.mrf.mxu0
    %981 = vdwg.mxu0
    %982 = vmatprep.subr.mxu0 0.0
    %983 = vmatpush1.msra.mxu0 %v887
    %984 = vmatprep.subr.mxu0 0.0
    %985 = vmatpush1.msra.mxu0 %v886
    %986 = vmatprep.subr.mxu0 0.0
    %987 = vmatpush1.msra.mxu0 %v885
    %988 = vmatprep.subr.mxu0 0.0
    %989 = vmatpush1.msra.mxu0 %v884
    %990 = vmatprep.subr.mxu0 0.0
    %991 = vmatpush1.msra.mxu0 %v883
    %992 = vmatprep.subr.mxu0 0.0
    %993 = vmatpush1.msra.mxu0 %v882
    %994 = vmatprep.subr.mxu0 0.0
    %995 = vmatpush1.msra.mxu0 %v881
    %996 = vmatprep.subr.mxu0 0.0
    %997 = vmatpush1.msra.mxu0 %v880
    %998 = vmatprep.subr.mxu0 0.0
    %999 = vmatpush1.msra.mxu0 %v879
    %1000 = vmatprep.subr.mxu0 0.0
    %1001 = vmatpush1.msra.mxu0 %v878
    %1002 = vmatprep.subr.mxu0 0.0
    %1003 = vmatpush1.msra.mxu0 %v877
    %1004 = vmatprep.subr.mxu0 0.0
    %1005 = vmatpush1.msra.mxu0 %v876
    %1006 = vmatprep.subr.mxu0 0.0
    %1007 = vmatpush1.msra.mxu0 %v875
    %1008 = vmatprep.subr.mxu0 0.0
    %1009 = vmatpush1.msra.mxu0 %v874
    %1010 = vmatprep.subr.mxu0 0.0
    %1011 = vmatpush1.msra.mxu0 %v873
    %1012 = vmatprep.subr.mxu0 0.0
    %1013 = vmatpush1.msra.mxu0 %v872
    %1014 = vmatprep.subr.mxu0 0.0
    %1015 = vmatpush2.msra.mxu0 %v903
    %1016 = vmatprep.subr.mxu0 0.0
    %1017 = vmatpush2.msra.mxu0 %v902
    %1018 = vmatprep.subr.mxu0 0.0
    %1019 = vmatpush2.msra.mxu0 %v901
    %1020 = vmatprep.subr.mxu0 0.0
    %1021 = vmatpush2.msra.mxu0 %v900
    %1022 = vmatprep.subr.mxu0 0.0
    %1023 = vmatpush2.msra.mxu0 %v899
    %1024 = vmatprep.subr.mxu0 0.0
    %1025 = vmatpush2.msra.mxu0 %v898
    %1026 = vmatprep.subr.mxu0 0.0
    %1027 = vmatpush2.msra.mxu0 %v897
    %1028 = vmatprep.subr.mxu0 0.0
    %1029 = vmatpush2.msra.mxu0 %v896
    %1030 = vmatprep.subr.mxu0 0.0
    %1031 = vmatpush2.msra.mxu0 %v895
    %1032 = vmatprep.subr.mxu0 0.0
    %1033 = vmatpush2.msra.mxu0 %v894
    %1034 = vmatprep.subr.mxu0 0.0
    %1035 = vmatpush2.msra.mxu0 %v893
    %1036 = vmatprep.subr.mxu0 0.0
    %1037 = vmatpush2.msra.mxu0 %v892
    %1038 = vmatprep.subr.mxu0 0.0
    %1039 = vmatpush2.msra.mxu0 %v891
    %1040 = vmatprep.subr.mxu0 0.0
    %1041 = vmatpush2.msra.mxu0 %v890
    %1042 = vmatprep.subr.mxu0 0.0
    %1043 = vmatpush2.msra.mxu0 %v889
    %1044 = vmatprep.subr.mxu0 0.0
    %1045 = vmatpush2.msra.mxu0 %v888
    %1046 = vmatprep.mubr.f32.mxu0 %v622
    %1047 = vmatmul.mubr.f32.gmra.mxu0 %v621
    %v1048 = vpop.f32.mrf.mxu0
    %v1049 = vadd.f32 %v979, %v1048
    %v1050 = vpop.f32.mrf.mxu0
    %1051 = vdwg.mxu0
    %1052 = vst [vmem:[#allocation10 + $0x8] sm:$0xff] %v1049
    %s1053 = scalar_lea.vmem [#allocation8], 1024
    %v1054 = vld [vmem:[%s1053] sm:$0xff]
    %v1055 = vld [vmem:[%s1053 + $0x8] sm:$0xff]
    %v1056 = vld [vmem:[%s1053 + $0x10] sm:$0xff]
    %v1057 = vld [vmem:[%s1053 + $0x18] sm:$0xff]
    %v1058 = vld [vmem:[%s1053 + $0x20] sm:$0xff]
    %v1059 = vld [vmem:[%s1053 + $0x28] sm:$0xff]
    %v1060 = vld [vmem:[%s1053 + $0x30] sm:$0xff]
    %v1061 = vld [vmem:[%s1053 + $0x38] sm:$0xff]
    %v1062 = vld [vmem:[%s1053 + $0x40] sm:$0xff]
    %v1063 = vld [vmem:[%s1053 + $0x48] sm:$0xff]
    %v1064 = vld [vmem:[%s1053 + $0x50] sm:$0xff]
    %v1065 = vld [vmem:[%s1053 + $0x58] sm:$0xff]
    %v1066 = vld [vmem:[%s1053 + $0x60] sm:$0xff]
    %v1067 = vld [vmem:[%s1053 + $0x68] sm:$0xff]
    %v1068 = vld [vmem:[%s1053 + $0x70] sm:$0xff]
    %v1069 = vld [vmem:[%s1053 + $0x78] sm:$0xff]
    %v1070 = vld [vmem:[%s1053 + $0x80] sm:$0xff]
    %v1071 = vld [vmem:[%s1053 + $0x88] sm:$0xff]
    %v1072 = vld [vmem:[%s1053 + $0x90] sm:$0xff]
    %v1073 = vld [vmem:[%s1053 + $0x98] sm:$0xff]
    %v1074 = vld [vmem:[%s1053 + $0xa0] sm:$0xff]
    %v1075 = vld [vmem:[%s1053 + $0xa8] sm:$0xff]
    %v1076 = vld [vmem:[%s1053 + $0xb0] sm:$0xff]
    %v1077 = vld [vmem:[%s1053 + $0xb8] sm:$0xff]
    %v1078 = vld [vmem:[%s1053 + $0xc0] sm:$0xff]
    %v1079 = vld [vmem:[%s1053 + $0xc8] sm:$0xff]
    %v1080 = vld [vmem:[%s1053 + $0xd0] sm:$0xff]
    %v1081 = vld [vmem:[%s1053 + $0xd8] sm:$0xff]
    %v1082 = vld [vmem:[%s1053 + $0xe0] sm:$0xff]
    %v1083 = vld [vmem:[%s1053 + $0xe8] sm:$0xff]
    %v1084 = vld [vmem:[%s1053 + $0xf0] sm:$0xff]
    %v1085 = vld [vmem:[%s1053 + $0xf8] sm:$0xff]
    %v1086 = vld [vmem:[%s1053 + $0x100] sm:$0xff]
    %v1087 = vld [vmem:[%s1053 + $0x108] sm:$0xff]
    %v1088 = vld [vmem:[%s1053 + $0x110] sm:$0xff]
    %v1089 = vld [vmem:[%s1053 + $0x118] sm:$0xff]
    %v1090 = vld [vmem:[%s1053 + $0x120] sm:$0xff]
    %v1091 = vld [vmem:[%s1053 + $0x128] sm:$0xff]
    %v1092 = vld [vmem:[%s1053 + $0x130] sm:$0xff]
    %v1093 = vld [vmem:[%s1053 + $0x138] sm:$0xff]
    %v1094 = vld [vmem:[%s1053 + $0x140] sm:$0xff]
    %v1095 = vld [vmem:[%s1053 + $0x148] sm:$0xff]
    %v1096 = vld [vmem:[%s1053 + $0x150] sm:$0xff]
    %v1097 = vld [vmem:[%s1053 + $0x158] sm:$0xff]
    %v1098 = vld [vmem:[%s1053 + $0x160] sm:$0xff]
    %v1099 = vld [vmem:[%s1053 + $0x168] sm:$0xff]
    %v1100 = vld [vmem:[%s1053 + $0x170] sm:$0xff]
    %v1101 = vld [vmem:[%s1053 + $0x178] sm:$0xff]
    %v1102 = vld [vmem:[%s1053 + $0x180] sm:$0xff]
    %v1103 = vld [vmem:[%s1053 + $0x188] sm:$0xff]
    %v1104 = vld [vmem:[%s1053 + $0x190] sm:$0xff]
    %v1105 = vld [vmem:[%s1053 + $0x198] sm:$0xff]
    %v1106 = vld [vmem:[%s1053 + $0x1a0] sm:$0xff]
    %v1107 = vld [vmem:[%s1053 + $0x1a8] sm:$0xff]
    %v1108 = vld [vmem:[%s1053 + $0x1b0] sm:$0xff]
    %v1109 = vld [vmem:[%s1053 + $0x1b8] sm:$0xff]
    %v1110 = vld [vmem:[%s1053 + $0x1c0] sm:$0xff]
    %v1111 = vld [vmem:[%s1053 + $0x1c8] sm:$0xff]
    %v1112 = vld [vmem:[%s1053 + $0x1d0] sm:$0xff]
    %v1113 = vld [vmem:[%s1053 + $0x1d8] sm:$0xff]
    %v1114 = vld [vmem:[%s1053 + $0x1e0] sm:$0xff]
    %v1115 = vld [vmem:[%s1053 + $0x1e8] sm:$0xff]
    %v1116 = vld [vmem:[%s1053 + $0x1f0] sm:$0xff]
    %v1117 = vld [vmem:[%s1053 + $0x1f8] sm:$0xff]
    %s1118 = scalar_lea.vmem %s4, 2
    %v1119 = vld [vmem:[%s1118] sm:$0x1]
    %v1121 = vlaneseq
    %v1122 = vshrl.u32 %v1121, 7
    %v1123 = vsub.s32 0, %v1122
    %v1124 = vrot.slane %v1119, %v1123
    %1126 = vmatprep.subr.mxu0 0.0
    %1127 = vmatpush1.msra.mxu0 %v1069
    %1128 = vmatprep.subr.mxu0 0.0
    %1129 = vmatpush1.msra.mxu0 %v1068
    %1130 = vmatprep.subr.mxu0 0.0
    %1131 = vmatpush1.msra.mxu0 %v1067
    %1132 = vmatprep.subr.mxu0 0.0
    %1133 = vmatpush1.msra.mxu0 %v1066
    %1134 = vmatprep.subr.mxu0 0.0
    %1135 = vmatpush1.msra.mxu0 %v1065
    %1136 = vmatprep.subr.mxu0 0.0
    %1137 = vmatpush1.msra.mxu0 %v1064
    %1138 = vmatprep.subr.mxu0 0.0
    %1139 = vmatpush1.msra.mxu0 %v1063
    %1140 = vmatprep.subr.mxu0 0.0
    %1141 = vmatpush1.msra.mxu0 %v1062
    %1142 = vmatprep.subr.mxu0 0.0
    %1143 = vmatpush1.msra.mxu0 %v1061
    %1144 = vmatprep.subr.mxu0 0.0
    %1145 = vmatpush1.msra.mxu0 %v1060
    %1146 = vmatprep.subr.mxu0 0.0
    %1147 = vmatpush1.msra.mxu0 %v1059
    %1148 = vmatprep.subr.mxu0 0.0
    %1149 = vmatpush1.msra.mxu0 %v1058
    %1150 = vmatprep.subr.mxu0 0.0
    %1151 = vmatpush1.msra.mxu0 %v1057
    %1152 = vmatprep.subr.mxu0 0.0
    %1153 = vmatpush1.msra.mxu0 %v1056
    %1154 = vmatprep.subr.mxu0 0.0
    %1155 = vmatpush1.msra.mxu0 %v1055
    %1156 = vmatprep.subr.mxu0 0.0
    %1157 = vmatpush1.msra.mxu0 %v1054
    %1158 = vmatprep.subr.mxu0 0.0
    %1159 = vmatpush2.msra.mxu0 %v1085
    %1160 = vmatprep.subr.mxu0 0.0
    %1161 = vmatpush2.msra.mxu0 %v1084
    %1162 = vmatprep.subr.mxu0 0.0
    %1163 = vmatpush2.msra.mxu0 %v1083
    %1164 = vmatprep.subr.mxu0 0.0
    %1165 = vmatpush2.msra.mxu0 %v1082
    %1166 = vmatprep.subr.mxu0 0.0
    %1167 = vmatpush2.msra.mxu0 %v1081
    %1168 = vmatprep.subr.mxu0 0.0
    %1169 = vmatpush2.msra.mxu0 %v1080
    %1170 = vmatprep.subr.mxu0 0.0
    %1171 = vmatpush2.msra.mxu0 %v1079
    %1172 = vmatprep.subr.mxu0 0.0
    %1173 = vmatpush2.msra.mxu0 %v1078
    %1174 = vmatprep.subr.mxu0 0.0
    %1175 = vmatpush2.msra.mxu0 %v1077
    %1176 = vmatprep.subr.mxu0 0.0
    %1177 = vmatpush2.msra.mxu0 %v1076
    %1178 = vmatprep.subr.mxu0 0.0
    %1179 = vmatpush2.msra.mxu0 %v1075
    %1180 = vmatprep.subr.mxu0 0.0
    %1181 = vmatpush2.msra.mxu0 %v1074
    %1182 = vmatprep.subr.mxu0 0.0
    %1183 = vmatpush2.msra.mxu0 %v1073
    %1184 = vmatprep.subr.mxu0 0.0
    %1185 = vmatpush2.msra.mxu0 %v1072
    %1186 = vmatprep.subr.mxu0 0.0
    %1187 = vmatpush2.msra.mxu0 %v1071
    %1188 = vmatprep.subr.mxu0 0.0
    %1189 = vmatpush2.msra.mxu0 %v1070
    %1190 = vmatprep.mubr.f32.mxu0 %v624
    %1191 = vmatmul.mubr.f32.gmra.mxu0 %v623
    %v1192 = vpop.f32.mrf.mxu0
    %v1193 = vadd.f32 %v1124, %v1192
    %v1194 = vpop.f32.mrf.mxu0
    %1195 = vdwg.mxu0
    %1196 = vmatprep.subr.mxu0 0.0
    %1197 = vmatpush1.msra.mxu0 %v1101
    %1198 = vmatprep.subr.mxu0 0.0
    %1199 = vmatpush1.msra.mxu0 %v1100
    %1200 = vmatprep.subr.mxu0 0.0
    %1201 = vmatpush1.msra.mxu0 %v1099
    %1202 = vmatprep.subr.mxu0 0.0
    %1203 = vmatpush1.msra.mxu0 %v1098
    %1204 = vmatprep.subr.mxu0 0.0
    %1205 = vmatpush1.msra.mxu0 %v1097
    %1206 = vmatprep.subr.mxu0 0.0
    %1207 = vmatpush1.msra.mxu0 %v1096
    %1208 = vmatprep.subr.mxu0 0.0
    %1209 = vmatpush1.msra.mxu0 %v1095
    %1210 = vmatprep.subr.mxu0 0.0
    %1211 = vmatpush1.msra.mxu0 %v1094
    %1212 = vmatprep.subr.mxu0 0.0
    %1213 = vmatpush1.msra.mxu0 %v1093
    %1214 = vmatprep.subr.mxu0 0.0
    %1215 = vmatpush1.msra.mxu0 %v1092
    %1216 = vmatprep.subr.mxu0 0.0
    %1217 = vmatpush1.msra.mxu0 %v1091
    %1218 = vmatprep.subr.mxu0 0.0
    %1219 = vmatpush1.msra.mxu0 %v1090
    %1220 = vmatprep.subr.mxu0 0.0
    %1221 = vmatpush1.msra.mxu0 %v1089
    %1222 = vmatprep.subr.mxu0 0.0
    %1223 = vmatpush1.msra.mxu0 %v1088
    %1224 = vmatprep.subr.mxu0 0.0
    %1225 = vmatpush1.msra.mxu0 %v1087
    %1226 = vmatprep.subr.mxu0 0.0
    %1227 = vmatpush1.msra.mxu0 %v1086
    %1228 = vmatprep.subr.mxu0 0.0
    %1229 = vmatpush2.msra.mxu0 %v1117
    %1230 = vmatprep.subr.mxu0 0.0
    %1231 = vmatpush2.msra.mxu0 %v1116
    %1232 = vmatprep.subr.mxu0 0.0
    %1233 = vmatpush2.msra.mxu0 %v1115
    %1234 = vmatprep.subr.mxu0 0.0
    %1235 = vmatpush2.msra.mxu0 %v1114
    %1236 = vmatprep.subr.mxu0 0.0
    %1237 = vmatpush2.msra.mxu0 %v1113
    %1238 = vmatprep.subr.mxu0 0.0
    %1239 = vmatpush2.msra.mxu0 %v1112
    %1240 = vmatprep.subr.mxu0 0.0
    %1241 = vmatpush2.msra.mxu0 %v1111
    %1242 = vmatprep.subr.mxu0 0.0
    %1243 = vmatpush2.msra.mxu0 %v1110
    %1244 = vmatprep.subr.mxu0 0.0
    %1245 = vmatpush2.msra.mxu0 %v1109
    %1246 = vmatprep.subr.mxu0 0.0
    %1247 = vmatpush2.msra.mxu0 %v1108
    %1248 = vmatprep.subr.mxu0 0.0
    %1249 = vmatpush2.msra.mxu0 %v1107
    %1250 = vmatprep.subr.mxu0 0.0
    %1251 = vmatpush2.msra.mxu0 %v1106
    %1252 = vmatprep.subr.mxu0 0.0
    %1253 = vmatpush2.msra.mxu0 %v1105
    %1254 = vmatprep.subr.mxu0 0.0
    %1255 = vmatpush2.msra.mxu0 %v1104
    %1256 = vmatprep.subr.mxu0 0.0
    %1257 = vmatpush2.msra.mxu0 %v1103
    %1258 = vmatprep.subr.mxu0 0.0
    %1259 = vmatpush2.msra.mxu0 %v1102
    %1260 = vmatprep.mubr.f32.mxu0 %v626
    %1261 = vmatmul.mubr.f32.gmra.mxu0 %v625
    %v1262 = vpop.f32.mrf.mxu0
    %v1263 = vadd.f32 %v1193, %v1262
    %v1264 = vpop.f32.mrf.mxu0
    %1265 = vdwg.mxu0
    %1266 = vst [vmem:[#allocation10 + $0x10] sm:$0xff] %v1263
    // Predicated region
    $region38: #{tpu_custom_call.1} parent=1 // pred_check
      _
    $region39: #{tpu_custom_call.1} parent=1 // pred_check_branch
      %1268 = sbr.rel (0) target = $region41
    $region40: #{tpu_custom_call.1} parent=1 // pred_region
      %s1270 = ssub.s32 384, 384
      %1271 = vsyncadd [#allocation4], %s1270
      %s1273 = sshll.u32 [#allocation10], 4
      %s1274 = int_to_ptr.vmem [resolvable:$true] %s1273
      %1276 = dma.vmem_to_hbm [thread:$0]  %s1274, 384, %s5, [#allocation4]
    $region41: #{tpu_custom_call.1} parent=1 // pred_fallthru
      _
    // Predicated region
    $region42: #{tpu_custom_call.1} parent=1 // pred_check
      _
    $region43: #{tpu_custom_call.1} parent=1 // pred_check_branch
      %1278 = sbr.rel (0) target = $region45
    $region44: #{tpu_custom_call.1} parent=1 // pred_region
      %1279 = dma.done [#allocation4], 384
    $region45: #{tpu_custom_call.1} parent=1 // pred_fallthru
      _
    %1280 = vsyncpa [#allocation3], 1
    %1281 = vsyncpa [#allocation6], 1
    %1282 = vsyncpa [#allocation9], 1
    %1283 = vsyncpa [#allocation4], 1

</llo_original>
